<compile_context>
chip_gen: v6e
topology: v6e:2x2x1
jax: 0.10.0
libtpu: 0.0.40
codegen_flags: <defaults>
</compile_context>

<pallas_src>
import functools

import jax
import jax.numpy as jnp
from jax.experimental import pallas as pl
from jax.experimental.pallas import tpu as pltpu


_TILE_BYTES_BUDGET = 2 * 1024 * 1024     # per lane-padded f32 logits tile (double-buffered)
_MAX_TILE_ROWS = 2048                    # cap so lane-padded (T,1) target/output stay small
_VMEM_LIMIT_BYTES = 32 * 1024 * 1024     # explicit scoped-VMEM limit (safe on v5e/v6e/v7x)


def _choose_tile_n(n, c):
    """Row-tile size: multiple of 8, bounded by a padded-f32 VMEM byte budget."""
    padded_c = ((c + 127) // 128) * 128          # lane padding of the (T, C) tile
    per_row_f32 = padded_c * 4                   # intermediates are f32
    tile = _TILE_BYTES_BUDGET // max(1, per_row_f32)
    tile = max(8, min(_MAX_TILE_ROWS, (tile // 8) * 8))
    if tile >= n:
        return n                                  # block == full dims is always legal
    return tile


def _ls_ce_kernel(logits_ref, target_ref, out_ref, *, n_classes, eps):
    # logits_ref: (T, C) in the input dtype; target_ref: (T, 1) int32.
    xf = logits_ref[...].astype(jnp.float32)                          # (T, C)

    # Numerically-stable logsumexp per row.
    row_max = jnp.max(xf, axis=-1, keepdims=True)                     # (T, 1)
    sum_exp = jnp.sum(jnp.exp(xf - row_max), axis=-1, keepdims=True)  # (T, 1)
    lse = row_max + jnp.log(sum_exp)                                  # (T, 1)

    # -sum_c log_softmax(x)_c = C*lse - sum_c x_c
    sum_x = jnp.sum(xf, axis=-1, keepdims=True)                       # (T, 1)

    # x[target] via iota-compare gather (no cross-lane shuffles needed).
    tgt = target_ref[...]                                             # (T, 1) int32
    col = jax.lax.broadcasted_iota(jnp.int32, xf.shape, 1)            # (T, C)
    picked = jnp.sum(jnp.where(col == tgt, xf, 0.0),
                     axis=-1, keepdims=True)                          # (T, 1)

    # eps*((C*lse - sum_x)/C) + (1-eps)*(lse - picked)
    #   = lse - (eps/C)*sum_x - (1-eps)*picked
    out_ref[...] = lse - (eps / n_classes) * sum_x - (1.0 - eps) * picked


@functools.partial(jax.jit, static_argnames=("reduction", "smoothing"))
def label_smoothing_cross_entropy(logits, target, *, reduction="mean",
                                  smoothing=0.1):
    n, c = logits.shape
    itemsize = jnp.dtype(logits.dtype).itemsize
    tile_n = _choose_tile_n(n, c)
    grid = (pl.cdiv(n, tile_n),)

    tgt2d = target.astype(jnp.int32).reshape(n, 1)

    cost = pl.CostEstimate(
        flops=6 * n * c,                                  # max/sub/sum/sum/cmp/select (approx)
        transcendentals=n * c + n,                        # exp over the tile + per-row log
        bytes_accessed=n * c * itemsize + n * 4 + n * 4,  # logits + target + per-row output
    )

    kernel = functools.partial(_ls_ce_kernel, n_classes=c, eps=float(smoothing))

    per_row = pl.pallas_call(
        kernel,
        out_shape=jax.ShapeDtypeStruct((n, 1), jnp.float32),
        grid_spec=pltpu.PrefetchScalarGridSpec(
            num_scalar_prefetch=0,
            grid=grid,
            in_specs=[
                pl.BlockSpec((tile_n, c), lambda i: (i, 0)),
                pl.BlockSpec((tile_n, 1), lambda i: (i, 0)),
            ],
            out_specs=pl.BlockSpec((tile_n, 1), lambda i: (i, 0)),
        ),
        compiler_params=pltpu.CompilerParams(
            dimension_semantics=("parallel",),
            vmem_limit_bytes=_VMEM_LIMIT_BYTES,
        ),
        cost_estimate=cost,
    )(logits, tgt2d)

    per_row = per_row[:, 0]

    if reduction == "mean":
        return jnp.mean(per_row)
    elif reduction == "sum":
        return jnp.sum(per_row)
    else:  # 'none'
        return per_row


def _reference(logits, target, reduction="mean", smoothing=0.1):
    log_preds = jax.nn.log_softmax(logits.astype(jnp.float32), axis=-1)
    per_row = -jnp.sum(log_preds, axis=-1)
    nll_row = -jnp.take_along_axis(log_preds, target[:, None], axis=-1)[:, 0]
    if reduction == "mean":
        loss, nll = jnp.mean(per_row), jnp.mean(nll_row)
    elif reduction == "sum":
        loss, nll = jnp.sum(per_row), jnp.sum(nll_row)
    else:
        loss, nll = per_row, nll_row
    c = logits.shape[-1]
    return smoothing * (loss / c) + (1.0 - smoothing) * nll


if __name__ == "__main__":
    key = jax.random.PRNGKey(0)

    # --- small, module-sized test (single full block path) ---
    k1, k2 = jax.random.split(key)
    N, C = 8, 32
    logits = jax.random.normal(k1, (N, C), dtype=jnp.float32)
    target = jax.random.randint(k2, (N,), 0, C, dtype=jnp.int32)

    for red in ("mean", "sum", "none"):
        out = jax.block_until_ready(
            label_smoothing_cross_entropy(logits, target,
                                          reduction=red, smoothing=0.1))
        ref = _reference(logits, target, reduction=red, smoothing=0.1)
        assert jnp.allclose(out, ref, rtol=1e-4, atol=1e-4), (red, out, ref)

    # --- larger test exercising the multi-tile grid + partial last block ---
    k3, k4 = jax.random.split(k1)
    N2, C2 = 2088, 256            # tile_n = 2048 -> grid of 2, last block partial
    logits2 = jax.random.normal(k3, (N2, C2), dtype=jnp.float32)
    target2 = jax.random.randint(k4, (N2,), 0, C2, dtype=jnp.int32)

    out2 = jax.block_until_ready(
        label_smoothing_cross_entropy(logits2, target2,
                                      reduction="mean", smoothing=0.1))
    ref2 = _reference(logits2, target2, reduction="mean", smoothing=0.1)
    assert jnp.allclose(out2, ref2, rtol=1e-4, atol=1e-4), (out2, ref2)

    # --- bf16 logits (native-dtype DMA, f32 math in-kernel) ---
    k5, k6 = jax.random.split(k3)
    N3, C3 = 512, 384
    logits3 = jax.random.normal(k5, (N3, C3), dtype=jnp.bfloat16)
    target3 = jax.random.randint(k6, (N3,), 0, C3, dtype=jnp.int32)

    out3 = jax.block_until_ready(
        label_smoothing_cross_entropy(logits3, target3,
                                      reduction="mean", smoothing=0.2))
    ref3 = _reference(logits3, target3, reduction="mean", smoothing=0.2)
    assert jnp.allclose(out3, ref3, rtol=1e-3, atol=1e-3), (out3, ref3)

    print("KERNEL_OK")
</pallas_src>

<mosaic_0001>
module attributes {stable_mosaic.version = 11 : i64} {
  func.func @_ls_ce_kernel(%arg0: i32, %arg1: memref<8x32xf32, #tpu.memory_space<vmem>>, %arg2: memref<8x1xi32, #tpu.memory_space<vmem>>, %arg3: memref<8x1xf32, #tpu.memory_space<vmem>>) attributes {dimension_semantics = [#tpu.dimension_semantics<parallel>], iteration_bounds = array<i64: 1>, scalar_prefetch = 0 : i64, scratch_operands = 0 : i64, tpu.core_type = #tpu.core_type<tc>, window_params = [{transform_indices = @transform_0, window_bounds = array<i64: 8, 32>}, {transform_indices = @transform_1, window_bounds = array<i64: 8, 1>}, {transform_indices = @transform_2, window_bounds = array<i64: 8, 1>}]} {
    %c0 = arith.constant 0 : index
    %c0_0 = arith.constant 0 : index
    %0 = vector.load %arg1[%c0, %c0_0] : memref<8x32xf32, #tpu.memory_space<vmem>>, vector<8x32xf32>
    %cst = arith.constant dense<0xFF800000> : vector<8xf32>
    %1 = vector.multi_reduction <maximumf>, %0, %cst [1] : vector<8x32xf32> to vector<8xf32>
    %2 = vector.shape_cast %1 : vector<8xf32> to vector<8x1xf32>
    %3 = vector.broadcast %2 : vector<8x1xf32> to vector<8x32xf32>
    %4 = arith.subf %0, %3 : vector<8x32xf32>
    %5 = math.exp %4 : vector<8x32xf32>
    %cst_1 = arith.constant dense<0.000000e+00> : vector<8xf32>
    %6 = vector.multi_reduction <add>, %5, %cst_1 [1] : vector<8x32xf32> to vector<8xf32>
    %7 = vector.shape_cast %6 : vector<8xf32> to vector<8x1xf32>
    %8 = math.log %7 : vector<8x1xf32>
    %9 = arith.addf %2, %8 : vector<8x1xf32>
    %cst_2 = arith.constant dense<0.000000e+00> : vector<8xf32>
    %10 = vector.multi_reduction <add>, %0, %cst_2 [1] : vector<8x32xf32> to vector<8xf32>
    %11 = vector.shape_cast %10 : vector<8xf32> to vector<8x1xf32>
    %c0_3 = arith.constant 0 : index
    %c0_4 = arith.constant 0 : index
    %12 = vector.load %arg2[%c0_3, %c0_4] : memref<8x1xi32, #tpu.memory_space<vmem>>, vector<8x1xi32>
    %13 = tpu.iota {dimensions = array<i32: 1>} : vector<8x32xi32>
    %14 = vector.broadcast %12 : vector<8x1xi32> to vector<8x32xi32>
    %15 = arith.cmpi eq, %13, %14 : vector<8x32xi32>
    %cst_5 = arith.constant 0.000000e+00 : f32
    %16 = vector.broadcast %cst_5 : f32 to vector<8x32xf32>
    %17 = arith.select %15, %0, %16 : vector<8x32xi1>, vector<8x32xf32>
    %cst_6 = arith.constant dense<0.000000e+00> : vector<8xf32>
    %18 = vector.multi_reduction <add>, %17, %cst_6 [1] : vector<8x32xf32> to vector<8xf32>
    %19 = vector.shape_cast %18 : vector<8xf32> to vector<8x1xf32>
    %cst_7 = arith.constant 3.125000e-03 : f32
    %20 = vector.broadcast %cst_7 : f32 to vector<8x1xf32>
    %21 = arith.mulf %20, %11 : vector<8x1xf32>
    %22 = arith.subf %9, %21 : vector<8x1xf32>
    %cst_8 = arith.constant 0.899999976 : f32
    %23 = vector.broadcast %cst_8 : f32 to vector<8x1xf32>
    %24 = arith.mulf %23, %19 : vector<8x1xf32>
    %25 = arith.subf %22, %24 : vector<8x1xf32>
    %c0_9 = arith.constant 0 : index
    %c0_10 = arith.constant 0 : index
    %26 = vector.load %arg3[%c0_9, %c0_10] : memref<8x1xf32, #tpu.memory_space<vmem>>, vector<8x1xf32>
    tpu.vector_store %arg3[%c0_9, %c0_10], %25 {strides = array<i32>} : memref<8x1xf32, #tpu.memory_space<vmem>>, vector<8x1xf32>,
    return
  }
  func.func @transform_0(%arg0: i32) -> (i32, i32) {
    %c0_i32 = arith.constant 0 : i32
    %c0_i32_0 = arith.constant 0 : i32
    return %arg0, %c0_i32 : i32, i32
  }
  func.func @transform_1(%arg0: i32) -> (i32, i32) {
    %c0_i32 = arith.constant 0 : i32
    %c0_i32_0 = arith.constant 0 : i32
    return %arg0, %c0_i32 : i32, i32
  }
  func.func @transform_2(%arg0: i32) -> (i32, i32) {
    %c0_i32 = arith.constant 0 : i32
    %c0_i32_0 = arith.constant 0 : i32
    return %arg0, %c0_i32 : i32, i32
  }
}

</mosaic_0001>

<llo_original>
// kernel: label_smoothing_cross_entropy.1
$region0: #{label_smoothing_cross_entropy.1}
  #allocation0 [shape = 'u32[]', space=smem, size = 0x4, offset = 0x4, fixed_abs, tag = 'smem constant byte address 0x4 - core index']
  #allocation1 [shape = 'u32[144,128]{1,0:T(1,128)}', space=vmem, size = 0x12000, scoped, tag = 'internal scratch']
  %s0 = inlined_call_operand.vmem [shape: f32[8,32], index: 0, kind: input, shape index: {}]
  %s1 = inlined_call_operand.vmem [shape: s32[8,1], index: 1, kind: input, shape index: {}]
  %s2 = inlined_call_operand.vmem [shape: f32[8,1], index: 2, kind: output, shape index: {}]
  %s3 = sld [smem:[#allocation0]]
  $region18: #{label_smoothing_cross_entropy.1} parent=0
    _
  %s5 = ssub.s32 1, %s3
  %s6 = scalar_select 0, %s5, %s3
  // Predicated region
  $region2: #{label_smoothing_cross_entropy.1} parent=0 // pred_check
    _
  $region3: #{label_smoothing_cross_entropy.1} parent=0 // pred_check_branch
    %8 = sbr.rel (0) target = $region5
  $region4: #{label_smoothing_cross_entropy.1} parent=0 // pred_region
    _
  $region5: #{label_smoothing_cross_entropy.1} parent=0 // pred_fallthru
    _
  // Predicated region
  $region6: #{label_smoothing_cross_entropy.1} parent=0 // pred_check
    _
  $region7: #{label_smoothing_cross_entropy.1} parent=0 // pred_check_branch
    %10 = sbr.rel (0) target = $region9
  $region8: #{label_smoothing_cross_entropy.1} parent=0 // pred_region
    _
  $region9: #{label_smoothing_cross_entropy.1} parent=0 // pred_fallthru
    _
  %v11 = vld [vmem:[%s0] sm:$0xff]
  %vm12 = vcmask 261120
  %v13 = vsel %vm12, %v11, -inf
  %14 = vmax.xlane.f32.xlu0 %v13
  %v15 = vpop.xlane.xlu0 %14
  %v16 = vsub.f32 %v11, %v15
  %v17 = vmul.f32 %v16, 1.442695
  %v18 = vpow.pop %v17
  %v19 = vsel %vm12, %v18, 0.0
  %20 = vadd.xlane.f32.xlu0 %v19
  %v21 = vpop.xlane.xlu0 %20
  %v22 = vlog2.pop %v21
  %v23 = vmul.f32 %v22, 0.6931472
  %v24 = vadd.f32 %v15, %v23
  %v25 = vsel %vm12, %v11, 0.0
  %26 = vadd.xlane.f32.xlu0 %v25
  %v27 = vpop.xlane.xlu0 %26
  %v28 = vld [vmem:[%s1] sm:$0xff]
  %v29 = vlaneseq
  %v30 = vand.u32 %v29, 127
  %31 = vset.pattern.permute.xlu0 0
  %32 = vperm.xlu0 %31, %v28
  %v33 = vpop.permute.xlu0 %32
  %vm34 = vcmp.eq.s32.totalorder %v30, %v33
  %v35 = vsel %vm34, %v11, 0.0
  %v36 = vsel %vm12, %v35, 0.0
  %37 = vadd.xlane.f32.xlu0 %v36
  %v38 = vpop.xlane.xlu0 %37
  %v39 = vmul.f32 %v27, 0.003125
  %v40 = vsub.f32 %v24, %v39
  %v41 = vmul.f32 %v38, 0.9
  %v42 = vsub.f32 %v40, %v41
  %vm43 = vcmask 7168
  %44 = vst.msk [vmem:[%s2] sm:$0xff] %vm43, %v42
  // Predicated region
  $region10: #{label_smoothing_cross_entropy.1} parent=0 // pred_check
    _
  $region11: #{label_smoothing_cross_entropy.1} parent=0 // pred_check_branch
    %46 = sbr.rel (0) target = $region13
  $region12: #{label_smoothing_cross_entropy.1} parent=0 // pred_region
    _
  $region13: #{label_smoothing_cross_entropy.1} parent=0 // pred_fallthru
    _
  // Predicated region
  $region14: #{label_smoothing_cross_entropy.1} parent=0 // pred_check
    _
  $region15: #{label_smoothing_cross_entropy.1} parent=0 // pred_check_branch
    %48 = sbr.rel (0) target = $region17
  $region16: #{label_smoothing_cross_entropy.1} parent=0 // pred_region
    _
  $region17: #{label_smoothing_cross_entropy.1} parent=0 // pred_fallthru
    _

</llo_original>
